<compile_context>
chip_gen: v5e
topology: v5e:2x2
jax: 0.10.0
libtpu: 0.0.40
codegen_flags: <defaults>
</compile_context>

<pallas_src>
import functools

import jax
import jax.numpy as jnp
from jax.experimental import pallas as pl
from jax.experimental.pallas import tpu as pltpu


def _tgcn_kernel(ahat_ref, x_ref, w_gcn_ref, b_gcn_ref, w_gate_ref, b_gate_ref,
                 w_lin_ref, b_lin_ref, y_ref, *, hidden):
    f32 = jnp.float32

    # (TN, N) @ (N, F): bf16 operands on the MXU, f32 accumulation.  Everything
    # downstream operates on (TN, small) f32 tiles only.
    ax = jnp.dot(ahat_ref[...], x_ref[...], preferred_element_type=f32)            # (TN, F)

    # Fused GCNConv for the z and h gates: [C_z | C_h] = Ahat X [Wz | Wh] + [bz | bh]
    c = jnp.dot(ax, w_gcn_ref[...], preferred_element_type=f32) + b_gcn_ref[...]    # (TN, 2H)

    # Fused gate linears (block-diagonal).  The H-half of Linear_g([C_g, H]) vanishes
    # because H = 0, so only the conv-half weights are applied.
    g = jnp.dot(c, w_gate_ref[...], preferred_element_type=f32) + b_gate_ref[...]   # (TN, 2H)

    z = jax.nn.sigmoid(g[:, :hidden])
    h_tilde = jnp.tanh(g[:, hidden:])
    h_new = (1.0 - z) * h_tilde          # Z*H + (1-Z)*H_tilde with H = 0
    y = jnp.maximum(h_new, 0.0)          # F.relu

    y_ref[...] = (jnp.dot(y, w_lin_ref[...], preferred_element_type=f32)
                  + b_lin_ref[...]).astype(y_ref.dtype)


def gcn_norm_dense(edge_index, edge_weight, num_nodes, dtype=jnp.float32):
    """Dense D^{-1/2}(A+I)D^{-1/2} matching PyG gcn_norm (graph has no pre-existing self-loops)."""
    src, dst = edge_index[0], edge_index[1]
    loop = jnp.arange(num_nodes, dtype=edge_index.dtype)
    src = jnp.concatenate([src, loop])
    dst = jnp.concatenate([dst, loop])
    w = jnp.concatenate([edge_weight.astype(dtype), jnp.ones((num_nodes,), dtype)])
    deg = jnp.zeros((num_nodes,), dtype).at[dst].add(w)
    dinv = jnp.where(deg > 0, jax.lax.rsqrt(deg), jnp.zeros_like(deg))
    norm = dinv[src] * w * dinv[dst]
    return jnp.zeros((num_nodes, num_nodes), dtype).at[dst, src].add(norm)


def init_params(key, node_features, hidden):
    """Matches the torch module's parameter structure (incl. the r gate, which is
    mathematically unused for a single forward with H=None)."""
    ks = jax.random.split(key, 12)

    def u(k, shape, fan_in):
        bound = 1.0 / (fan_in ** 0.5)
        return jax.random.uniform(k, shape, jnp.float32, -bound, bound)

    params = {}
    # GCNConv linear weights stored transposed to (in, out); GCNConv bias starts at zero.
    for i, g in enumerate(("z", "r", "h")):
        params[f"w_{g}"] = u(ks[i], (node_features, hidden), node_features)
        params[f"b_{g}"] = jnp.zeros((1, hidden), jnp.float32)
    # Gate Linear(2*hidden, hidden): torch weight is (hidden, 2*hidden).
    # Split into conv-half / H-half, transposed to (hidden, hidden) each.
    for i, g in enumerate(("z", "r", "h")):
        wl = u(ks[3 + 2 * i], (hidden, 2 * hidden), 2 * hidden)
        params[f"wl_{g}_c"] = wl[:, :hidden].T
        params[f"wl_{g}_h"] = wl[:, hidden:].T
        params[f"bl_{g}"] = u(ks[4 + 2 * i], (1, hidden), 2 * hidden)
    # Final Linear(hidden, 1)
    params["w_lin"] = u(ks[10], (hidden, 1), hidden)
    params["b_lin"] = u(ks[11], (1, 1), hidden)
    return params


def _round_up(a, m):
    return (a + m - 1) // m * m


def recurrent_gcn_forward(params, x, edge_index, edge_weight, *,
                          tile_n=None, adj_dtype=jnp.bfloat16):
    n, _ = x.shape
    hidden = params["w_z"].shape[1]

    # Normalized dense adjacency, streamed in bf16 (halves the dominant N^2 HBM bytes).
    ahat = gcn_norm_dense(edge_index, edge_weight, n, jnp.float32).astype(adj_dtype)
    x_in = x.astype(adj_dtype)

    # ---- row tiling ---------------------------------------------------------------
    if tile_n is None:
        tile_n = 512                     # large tiles amortize the ~0.35us/step overhead
    tile_n = min(_round_up(tile_n, 16), _round_up(n, 16))
    # Keep the double-buffered adjacency stream comfortably inside VMEM (v7x: 64 MiB phys).
    adj_itemsize = jnp.dtype(adj_dtype).itemsize
    while tile_n > 16 and 2 * tile_n * n * adj_itemsize > 24 * 1024 * 1024:
        tile_n //= 2
    tile_n = _round_up(tile_n, 16)
    n_pad = _round_up(n, tile_n)         # pad rows so no partial tile is ever dropped
    if n_pad != n:
        ahat = jnp.pad(ahat, ((0, n_pad - n), (0, 0)))

    # ---- fused weights (only the live z/h path; r-gate and H-terms are zero) -------
    w_gcn = jnp.concatenate([params["w_z"], params["w_h"]], axis=1)          # (F, 2H)
    b_gcn = jnp.concatenate([params["b_z"], params["b_h"]], axis=1)          # (1, 2H)
    zeros_hh = jnp.zeros((hidden, hidden), jnp.float32)
    w_gate = jnp.block([[params["wl_z_c"], zeros_hh],
                        [zeros_hh, params["wl_h_c"]]])                       # (2H, 2H)
    b_gate = jnp.concatenate([params["bl_z"], params["bl_h"]], axis=1)       # (1, 2H)

    args = (ahat, x_in, w_gcn, b_gcn, w_gate, b_gate,
            params["w_lin"], params["b_lin"])

    def full_spec(shape):
        return pl.BlockSpec(shape, lambda i: (0,) * len(shape))

    in_specs = [pl.BlockSpec((tile_n, n), lambda i: (i, 0))]   # adjacency rows: the only stream
    in_specs += [full_spec(a.shape) for a in args[1:]]         # features + weights stay resident

    y_pad = pl.pallas_call(
        functools.partial(_tgcn_kernel, hidden=hidden),
        out_shape=jax.ShapeDtypeStruct((n_pad, 1), x.dtype),
        grid=(pl.cdiv(n_pad, tile_n),),
        in_specs=in_specs,
        out_specs=pl.BlockSpec((tile_n, 1), lambda i: (i, 0)),
        compiler_params=pltpu.CompilerParams(
            dimension_semantics=("parallel",),
            vmem_limit_bytes=48 * 1024 * 1024,
        ),
    )(*args)
    return y_pad[:n]


if __name__ == "__main__":
    key = jax.random.PRNGKey(0)
    num_nodes, node_features, hidden = 32, 4, 32
    kx, kw, kp = jax.random.split(key, 3)

    x = jax.random.normal(kx, (num_nodes, node_features), jnp.float32)

    # deterministic ring graph (both directions), no self-loops
    src = jnp.arange(num_nodes, dtype=jnp.int32)
    dst = (src + 1) % num_nodes
    edge_index = jnp.stack([jnp.concatenate([src, dst]),
                            jnp.concatenate([dst, src])], axis=0)
    edge_weight = jax.random.uniform(kw, (edge_index.shape[1],), jnp.float32, 0.5, 1.5)

    params = init_params(kp, node_features, hidden)

    y = recurrent_gcn_forward(params, x, edge_index, edge_weight)
    jax.block_until_ready(y)
    assert y.shape == (num_nodes, 1) and y.dtype == jnp.float32
    assert bool(jnp.all(jnp.isfinite(y)))
    print("KERNEL_OK")
</pallas_src>

<mosaic_0001>
module attributes {stable_mosaic.version = 11 : i64} {
  func.func @_tgcn_kernel(%arg0: i32, %arg1: memref<32x32xbf16, #tpu.memory_space<vmem>>, %arg2: memref<32x4xbf16, #tpu.memory_space<vmem>>, %arg3: memref<4x64xf32, #tpu.memory_space<vmem>>, %arg4: memref<1x64xf32, #tpu.memory_space<vmem>>, %arg5: memref<64x64xf32, #tpu.memory_space<vmem>>, %arg6: memref<1x64xf32, #tpu.memory_space<vmem>>, %arg7: memref<32x1xf32, #tpu.memory_space<vmem>>, %arg8: memref<1x1xf32, #tpu.memory_space<vmem>>, %arg9: memref<32x1xf32, #tpu.memory_space<vmem>>) attributes {dimension_semantics = [#tpu.dimension_semantics<parallel>], iteration_bounds = array<i64: 1>, scalar_prefetch = 0 : i64, scratch_operands = 0 : i64, tpu.core_type = #tpu.core_type<tc>, window_params = [{transform_indices = @transform_0, window_bounds = array<i64: 32, 32>}, {pipeline_mode = #tpu.pipeline_mode<synchronous>, transform_indices = @transform_1, window_bounds = array<i64: 32, 4>}, {pipeline_mode = #tpu.pipeline_mode<synchronous>, transform_indices = @transform_2, window_bounds = array<i64: 4, 64>}, {pipeline_mode = #tpu.pipeline_mode<synchronous>, transform_indices = @transform_3, window_bounds = array<i64: 1, 64>}, {pipeline_mode = #tpu.pipeline_mode<synchronous>, transform_indices = @transform_4, window_bounds = array<i64: 64, 64>}, {pipeline_mode = #tpu.pipeline_mode<synchronous>, transform_indices = @transform_5, window_bounds = array<i64: 1, 64>}, {pipeline_mode = #tpu.pipeline_mode<synchronous>, transform_indices = @transform_6, window_bounds = array<i64: 32, 1>}, {pipeline_mode = #tpu.pipeline_mode<synchronous>, transform_indices = @transform_7, window_bounds = array<i64: 1, 1>}, {transform_indices = @transform_8, window_bounds = array<i64: 32, 1>}]} {
    %c0 = arith.constant 0 : index
    %c0_0 = arith.constant 0 : index
    %0 = vector.load %arg1[%c0, %c0_0] : memref<32x32xbf16, #tpu.memory_space<vmem>>, vector<32x32xbf16>
    %c0_1 = arith.constant 0 : index
    %c0_2 = arith.constant 0 : index
    %1 = vector.load %arg2[%c0_1, %c0_2] : memref<32x4xbf16, #tpu.memory_space<vmem>>, vector<32x4xbf16>
    %cst = arith.constant dense<0.000000e+00> : vector<32x4xf32>
    %2 = tpu.matmul %0, %1, %cst {dimension_numbers = #tpu.dot_dimension_numbers<[1], [0], [0], [1], [0, 0, 1, 1], [], []>} : vector<32x32xbf16>, vector<32x4xbf16>, vector<32x4xf32> -> vector<32x4xf32>
    %c0_3 = arith.constant 0 : index
    %c0_4 = arith.constant 0 : index
    %3 = vector.load %arg3[%c0_3, %c0_4] : memref<4x64xf32, #tpu.memory_space<vmem>>, vector<4x64xf32>
    %cst_5 = arith.constant dense<0.000000e+00> : vector<32x64xf32>
    %4 = tpu.matmul %2, %3, %cst_5 {dimension_numbers = #tpu.dot_dimension_numbers<[1], [0], [0], [1], [0, 0, 1, 1], [], []>} : vector<32x4xf32>, vector<4x64xf32>, vector<32x64xf32> -> vector<32x64xf32>
    %c0_6 = arith.constant 0 : index
    %c0_7 = arith.constant 0 : index
    %5 = vector.load %arg4[%c0_6, %c0_7] : memref<1x64xf32, #tpu.memory_space<vmem>>, vector<1x64xf32>
    %6 = vector.broadcast %5 : vector<1x64xf32> to vector<32x64xf32>
    %7 = arith.addf %4, %6 : vector<32x64xf32>
    %c0_8 = arith.constant 0 : index
    %c0_9 = arith.constant 0 : index
    %8 = vector.load %arg5[%c0_8, %c0_9] : memref<64x64xf32, #tpu.memory_space<vmem>>, vector<64x64xf32>
    %cst_10 = arith.constant dense<0.000000e+00> : vector<32x64xf32>
    %9 = tpu.matmul %7, %8, %cst_10 {dimension_numbers = #tpu.dot_dimension_numbers<[1], [0], [0], [1], [0, 0, 1, 1], [], []>} : vector<32x64xf32>, vector<64x64xf32>, vector<32x64xf32> -> vector<32x64xf32>
    %c0_11 = arith.constant 0 : index
    %c0_12 = arith.constant 0 : index
    %10 = vector.load %arg6[%c0_11, %c0_12] : memref<1x64xf32, #tpu.memory_space<vmem>>, vector<1x64xf32>
    %11 = vector.broadcast %10 : vector<1x64xf32> to vector<32x64xf32>
    %12 = arith.addf %9, %11 : vector<32x64xf32>
    %13 = vector.extract_strided_slice %12 {offsets = [0, 0], sizes = [32, 32], strides = [1, 1]} : vector<32x64xf32> to vector<32x32xf32>
    %14 = arith.negf %13 : vector<32x32xf32>
    %15 = math.exp %14 : vector<32x32xf32>
    %cst_13 = arith.constant 1.000000e+00 : f32
    %16 = vector.broadcast %cst_13 : f32 to vector<32x32xf32>
    %17 = arith.addf %16, %15 : vector<32x32xf32>
    %18 = arith.divf %16, %17 : vector<32x32xf32>
    %19 = vector.extract_strided_slice %12 {offsets = [0, 32], sizes = [32, 32], strides = [1, 1]} : vector<32x64xf32> to vector<32x32xf32>
    %20 = math.tanh %19 : vector<32x32xf32>
    %cst_14 = arith.constant 1.000000e+00 : f32
    %21 = vector.broadcast %cst_14 : f32 to vector<32x32xf32>
    %22 = arith.subf %21, %18 : vector<32x32xf32>
    %23 = arith.mulf %22, %20 : vector<32x32xf32>
    %cst_15 = arith.constant 0.000000e+00 : f32
    %24 = vector.broadcast %cst_15 : f32 to vector<32x32xf32>
    %25 = arith.maximumf %23, %24 : vector<32x32xf32>
    %c0_16 = arith.constant 0 : index
    %c0_17 = arith.constant 0 : index
    %26 = vector.load %arg7[%c0_16, %c0_17] : memref<32x1xf32, #tpu.memory_space<vmem>>, vector<32x1xf32>
    %cst_18 = arith.constant dense<0.000000e+00> : vector<32x1xf32>
    %27 = tpu.matmul %25, %26, %cst_18 {dimension_numbers = #tpu.dot_dimension_numbers<[1], [0], [0], [1], [0, 0, 1, 1], [], []>} : vector<32x32xf32>, vector<32x1xf32>, vector<32x1xf32> -> vector<32x1xf32>
    %c0_19 = arith.constant 0 : index
    %c0_20 = arith.constant 0 : index
    %28 = vector.load %arg8[%c0_19, %c0_20] : memref<1x1xf32, #tpu.memory_space<vmem>>, vector<1x1xf32>
    %29 = vector.broadcast %28 : vector<1x1xf32> to vector<32x1xf32>
    %30 = arith.addf %27, %29 : vector<32x1xf32>
    %c0_21 = arith.constant 0 : index
    %c0_22 = arith.constant 0 : index
    %31 = vector.load %arg9[%c0_21, %c0_22] : memref<32x1xf32, #tpu.memory_space<vmem>>, vector<32x1xf32>
    tpu.vector_store %arg9[%c0_21, %c0_22], %30 {strides = array<i32>} : memref<32x1xf32, #tpu.memory_space<vmem>>, vector<32x1xf32>,
    return
  }
  func.func @transform_0(%arg0: i32) -> (i32, i32) {
    %c0_i32 = arith.constant 0 : i32
    %c0_i32_0 = arith.constant 0 : i32
    return %arg0, %c0_i32 : i32, i32
  }
  func.func @transform_1(%arg0: i32) -> (i32, i32) {
    %c0_i32 = arith.constant 0 : i32
    %c0_i32_0 = arith.constant 0 : i32
    %c0_i32_1 = arith.constant 0 : i32
    return %c0_i32, %c0_i32_0 : i32, i32
  }
  func.func @transform_2(%arg0: i32) -> (i32, i32) {
    %c0_i32 = arith.constant 0 : i32
    %c0_i32_0 = arith.constant 0 : i32
    %c0_i32_1 = arith.constant 0 : i32
    return %c0_i32, %c0_i32_0 : i32, i32
  }
  func.func @transform_3(%arg0: i32) -> (i32, i32) {
    %c0_i32 = arith.constant 0 : i32
    %c0_i32_0 = arith.constant 0 : i32
    %c0_i32_1 = arith.constant 0 : i32
    return %c0_i32, %c0_i32_0 : i32, i32
  }
  func.func @transform_4(%arg0: i32) -> (i32, i32) {
    %c0_i32 = arith.constant 0 : i32
    %c0_i32_0 = arith.constant 0 : i32
    %c0_i32_1 = arith.constant 0 : i32
    return %c0_i32, %c0_i32_0 : i32, i32
  }
  func.func @transform_5(%arg0: i32) -> (i32, i32) {
    %c0_i32 = arith.constant 0 : i32
    %c0_i32_0 = arith.constant 0 : i32
    %c0_i32_1 = arith.constant 0 : i32
    return %c0_i32, %c0_i32_0 : i32, i32
  }
  func.func @transform_6(%arg0: i32) -> (i32, i32) {
    %c0_i32 = arith.constant 0 : i32
    %c0_i32_0 = arith.constant 0 : i32
    %c0_i32_1 = arith.constant 0 : i32
    return %c0_i32, %c0_i32_0 : i32, i32
  }
  func.func @transform_7(%arg0: i32) -> (i32, i32) {
    %c0_i32 = arith.constant 0 : i32
    %c0_i32_0 = arith.constant 0 : i32
    %c0_i32_1 = arith.constant 0 : i32
    return %c0_i32, %c0_i32_0 : i32, i32
  }
  func.func @transform_8(%arg0: i32) -> (i32, i32) {
    %c0_i32 = arith.constant 0 : i32
    %c0_i32_0 = arith.constant 0 : i32
    return %arg0, %c0_i32 : i32, i32
  }
}

</mosaic_0001>

<llo_original>
// kernel: tpu_custom_call.1
$region0: #{tpu_custom_call.1}
  #allocation0 [shape = 'u32[]', space=smem, size = 0x4, offset = 0x4, fixed_abs, tag = 'smem constant byte address 0x4 - core index']
  #allocation1 [shape = 'u32[72,128]{1,0:T(1,128)}', space=vmem, size = 0x9000, scoped, tag = 'internal scratch']
  #allocation2 [shape = 'f32[1,1]{1,0:T(1,128)S(1)}', space=vmem, size = 0x200, scoped, tag = 'scoped memory for tpu_custom_call.1']
  %s0 = inlined_call_operand.vmem [shape: bf16[32,32], index: 0, kind: input, shape index: {}]
  %s1 = inlined_call_operand.vmem [shape: bf16[32,4], index: 1, kind: input, shape index: {}]
  %s2 = inlined_call_operand.vmem [shape: f32[4,64], index: 2, kind: input, shape index: {}]
  %s3 = inlined_call_operand.vmem [shape: f32[1,64], index: 3, kind: input, shape index: {}]
  %s4 = inlined_call_operand.hbm [shape: f32[64,64], index: 4, kind: input, shape index: {}]
  %s5 = inlined_call_operand.vmem [shape: f32[1,64], index: 5, kind: input, shape index: {}]
  %s6 = inlined_call_operand.vmem [shape: f32[32,1], index: 6, kind: input, shape index: {}]
  %s7 = inlined_call_operand.<no memory space> [shape: f32[1,1], index: 7, kind: input, shape index: {}]
  %s8 = inlined_call_operand.vmem [shape: f32[32,1], index: 8, kind: output, shape index: {}]
  %s9 = sld [smem:[#allocation0]]
  $region46: #{tpu_custom_call.1} parent=0
    _
  %s11 = ssub.s32 1, %s9
  %s12 = scalar_select 0, %s11, %s9
  %v13 = vstv %s7
  %14 = vst [vmem:[#allocation2] sm:$0x1] %v13
  $region1: #{tpu_custom_call.1} parent=0
    #allocation3 [shape = 'u8[32768]{0}', space=vmem, size = 0x8000, scoped, tag = 'input window, operand 4, single buffered']
    #allocation4 [shape = 's32[1]{0}', space=sflag, size = 0x4, scoped, tag = 'scoped memory for tpu_custom_call.1']
    %15 = vsyncpa [#allocation4], 0
    // Predicated region
    $region2: #{tpu_custom_call.1} parent=1 // pred_check
      _
    $region3: #{tpu_custom_call.1} parent=1 // pred_check_branch
      %17 = sbr.rel (0) target = $region5
    $region4: #{tpu_custom_call.1} parent=1 // pred_region
      _
    $region5: #{tpu_custom_call.1} parent=1 // pred_fallthru
      _
    // Predicated region
    $region6: #{tpu_custom_call.1} parent=1 // pred_check
      _
    $region7: #{tpu_custom_call.1} parent=1 // pred_check_branch
      %19 = sbr.rel (0) target = $region9
    $region8: #{tpu_custom_call.1} parent=1 // pred_region
      _
    $region9: #{tpu_custom_call.1} parent=1 // pred_fallthru
      _
    // Predicated region
    $region10: #{tpu_custom_call.1} parent=1 // pred_check
      _
    $region11: #{tpu_custom_call.1} parent=1 // pred_check_branch
      %21 = sbr.rel (0) target = $region13
    $region12: #{tpu_custom_call.1} parent=1 // pred_region
      _
    $region13: #{tpu_custom_call.1} parent=1 // pred_fallthru
      _
    // Predicated region
    $region14: #{tpu_custom_call.1} parent=1 // pred_check
      _
    $region15: #{tpu_custom_call.1} parent=1 // pred_check_branch
      %23 = sbr.rel (0) target = $region17
    $region16: #{tpu_custom_call.1} parent=1 // pred_region
      _
    $region17: #{tpu_custom_call.1} parent=1 // pred_fallthru
      _
    // Predicated region
    $region18: #{tpu_custom_call.1} parent=1 // pred_check
      _
    $region19: #{tpu_custom_call.1} parent=1 // pred_check_branch
      %25 = sbr.rel (0) target = $region21
    $region20: #{tpu_custom_call.1} parent=1 // pred_region
      %27 = vsyncadd [#allocation4], 0
      %s28 = sshll.u32 %s4, 4
      %s29 = int_to_ptr.hbm [resolvable:$true] %s28
      %s30 = sshll.u32 [#allocation3], 4
      %s31 = int_to_ptr.vmem [resolvable:$true] %s30
      %36 = dma.hbm_to_vmem [thread:$0]  %s29, 1024, %s31, [#allocation4], 128, 128, 8
    $region21: #{tpu_custom_call.1} parent=1 // pred_fallthru
      _
    // Predicated region
    $region22: #{tpu_custom_call.1} parent=1 // pred_check
      _
    $region23: #{tpu_custom_call.1} parent=1 // pred_check_branch
      %38 = sbr.rel (0) target = $region25
    $region24: #{tpu_custom_call.1} parent=1 // pred_region
      _
    $region25: #{tpu_custom_call.1} parent=1 // pred_fallthru
      _
    // Predicated region
    $region26: #{tpu_custom_call.1} parent=1 // pred_check
      _
    $region27: #{tpu_custom_call.1} parent=1 // pred_check_branch
      %40 = sbr.rel (0) target = $region29
    $region28: #{tpu_custom_call.1} parent=1 // pred_region
      _
    $region29: #{tpu_custom_call.1} parent=1 // pred_fallthru
      _
    // Predicated region
    $region30: #{tpu_custom_call.1} parent=1 // pred_check
      _
    $region31: #{tpu_custom_call.1} parent=1 // pred_check_branch
      %42 = sbr.rel (0) target = $region33
    $region32: #{tpu_custom_call.1} parent=1 // pred_region
      _
    $region33: #{tpu_custom_call.1} parent=1 // pred_fallthru
      _
    // Predicated region
    $region34: #{tpu_custom_call.1} parent=1 // pred_check
      _
    $region35: #{tpu_custom_call.1} parent=1 // pred_check_branch
      %44 = sbr.rel (0) target = $region37
    $region36: #{tpu_custom_call.1} parent=1 // pred_region
      %46 = dma.done [#allocation4], 1024
    $region37: #{tpu_custom_call.1} parent=1 // pred_fallthru
      _
    %v48 = vld [vmem:[%s0] sm:$0xf]
    %v49 = vld [vmem:[%s0 + $0x4] sm:$0xf]
    %v50 = vld [vmem:[%s0 + $0x8] sm:$0xf]
    %v51 = vld [vmem:[%s0 + $0xc] sm:$0xf]
    %v52 = vld [vmem:[%s1] sm:$0xf]
    %v53 = vld [vmem:[%s1 + $0x4] sm:$0xf]
    %v54 = vld [vmem:[%s1 + $0x8] sm:$0xf]
    %v55 = vld [vmem:[%s1 + $0xc] sm:$0xf]
    %v60 = vunpack.c.l.b16 %v48
    %v61 = vunpack.c.l.b16 %v49
    %v62 = vunpack.c.l.b16 %v50
    %v63 = vunpack.c.l.b16 %v51
    %v64 = vpack.c.b16 %v61, %v60
    %v65 = vpack.c.b16 %v63, %v62
    %v70 = vunpack.c.l.b16 %v52
    %v71 = vunpack.c.l.b16 %v53
    %v72 = vunpack.c.l.b16 %v54
    %v73 = vunpack.c.l.b16 %v55
    %v74 = vpack.c.b16 %v71, %v70
    %v75 = vpack.c.b16 %v73, %v72
    %vm78 = vcmask 261120
    %v80 = vsel %vm78, %v64, 0
    %v83 = vsel %vm78, %v65, 0
    %85 = vmatpush.bf16.msra.mxu0 0
    %86 = vmatpush.bf16.msra.mxu0 0
    %87 = vmatpush.bf16.msra.mxu0 0
    %88 = vmatpush.bf16.msra.mxu0 0
    %89 = vmatpush.bf16.msra.mxu0 0
    %90 = vmatpush.bf16.msra.mxu0 0
    %91 = vmatpush.bf16.msra.mxu0 %v75
    %92 = vmatpush.bf16.msra.mxu0 %v74
    %93 = vmatmul.bf16.gmra.mxu0 %v80
    %v94 = vpop.f32.mrf.mxu0
    %v95 = vadd.f32 0.0, %v94
    %v96 = vpop.f32.mrf.mxu0
    %v97 = vadd.f32 0.0, %v96
    %98 = vmatmul.bf16.gmra.mxu0 %v83
    %v99 = vpop.f32.mrf.mxu0
    %v100 = vadd.f32 0.0, %v99
    %v101 = vpop.f32.mrf.mxu0
    %v102 = vadd.f32 0.0, %v101
    %103 = vdwg.mxu0
    %v104 = vld [vmem:[%s2] sm:$0xf]
    %v105 = vld [vmem:[%s3] sm:$0x1]
    %v107 = vperm.slane %v105, 0
    %vm109 = vcmask 31744
    %v111 = vsel %vm109, %v95, 0
    %v114 = vsel %vm109, %v97, 0
    %v117 = vsel %vm109, %v100, 0
    %v120 = vsel %vm109, %v102, 0
    %vm122 = vcmask 1043456
    %v124 = vsel %vm122, %v104, 0
    %126 = vmatpush.msra.mxu0 0.0
    %127 = vmatpush.msra.mxu0 0.0
    %128 = vmatpush.msra.mxu0 0.0
    %129 = vmatpush.msra.mxu0 0.0
    %130 = vmatpush.msra.mxu0 0.0
    %131 = vmatpush.msra.mxu0 0.0
    %132 = vmatpush.msra.mxu0 0.0
    %133 = vmatpush.msra.mxu0 0.0
    %134 = vmatpush.msra.mxu0 0.0
    %135 = vmatpush.msra.mxu0 0.0
    %136 = vmatpush.msra.mxu0 0.0
    %137 = vmatpush.msra.mxu0 0.0
    %138 = vmatpush.msra.mxu0 0.0
    %139 = vmatpush.msra.mxu0 0.0
    %140 = vmatpush.msra.mxu0 0.0
    %141 = vmatpush.msra.mxu0 %v124
    %142 = vmatmul.f32.gmra.mxu0 %v111
    %v143 = vpop.f32.mrf.mxu0
    %v144 = vadd.f32 %v107, %v143
    %145 = vmatmul.f32.gmra.mxu0 %v114
    %v146 = vpop.f32.mrf.mxu0
    %v147 = vadd.f32 %v107, %v146
    %148 = vmatmul.f32.gmra.mxu0 %v117
    %v149 = vpop.f32.mrf.mxu0
    %v150 = vadd.f32 %v107, %v149
    %151 = vmatmul.f32.gmra.mxu0 %v120
    %v152 = vpop.f32.mrf.mxu0
    %v153 = vadd.f32 %v107, %v152
    %154 = vdwg.mxu0
    %v155 = vld [vmem:[#allocation3] sm:$0xff]
    %v156 = vld [vmem:[#allocation3 + $0x8] sm:$0xff]
    %v157 = vld [vmem:[#allocation3 + $0x10] sm:$0xff]
    %v158 = vld [vmem:[#allocation3 + $0x18] sm:$0xff]
    %v159 = vld [vmem:[#allocation3 + $0x20] sm:$0xff]
    %v160 = vld [vmem:[#allocation3 + $0x28] sm:$0xff]
    %v161 = vld [vmem:[#allocation3 + $0x30] sm:$0xff]
    %v162 = vld [vmem:[#allocation3 + $0x38] sm:$0xff]
    %v163 = vld [vmem:[%s5] sm:$0x1]
    %v165 = vperm.slane %v163, 0
    %vm167 = vcmask 523264
    %v169 = vsel %vm167, %v144, 0
    %v172 = vsel %vm167, %v147, 0
    %v175 = vsel %vm167, %v150, 0
    %v178 = vsel %vm167, %v153, 0
    %180 = vmatpush.msra.mxu0 0.0
    %181 = vmatpush.msra.mxu0 0.0
    %182 = vmatpush.msra.mxu0 0.0
    %183 = vmatpush.msra.mxu0 0.0
    %184 = vmatpush.msra.mxu0 0.0
    %185 = vmatpush.msra.mxu0 0.0
    %186 = vmatpush.msra.mxu0 0.0
    %187 = vmatpush.msra.mxu0 0.0
    %188 = vmatpush.msra.mxu0 %v162
    %189 = vmatpush.msra.mxu0 %v161
    %190 = vmatpush.msra.mxu0 %v160
    %191 = vmatpush.msra.mxu0 %v159
    %192 = vmatpush.msra.mxu0 %v158
    %193 = vmatpush.msra.mxu0 %v157
    %194 = vmatpush.msra.mxu0 %v156
    %195 = vmatpush.msra.mxu0 %v155
    %196 = vmatmul.f32.gmra.mxu0 %v169
    %v197 = vpop.f32.mrf.mxu0
    %v198 = vadd.f32 %v165, %v197
    %199 = vmatmul.f32.gmra.mxu0 %v172
    %v200 = vpop.f32.mrf.mxu0
    %v201 = vadd.f32 %v165, %v200
    %202 = vmatmul.f32.gmra.mxu0 %v175
    %v203 = vpop.f32.mrf.mxu0
    %v204 = vadd.f32 %v165, %v203
    %205 = vmatmul.f32.gmra.mxu0 %v178
    %v206 = vpop.f32.mrf.mxu0
    %v207 = vadd.f32 %v165, %v206
    %208 = vdwg.mxu0
    %v209 = vxor.u32 %v198, 2147483648
    %v210 = vxor.u32 %v201, 2147483648
    %v211 = vxor.u32 %v204, 2147483648
    %v212 = vxor.u32 %v207, 2147483648
    %v213 = vmul.f32 %v209, 1.442695
    %v214 = vpow.pop %v213
    %v215 = vmul.f32 %v210, 1.442695
    %v216 = vpow.pop %v215
    %v217 = vmul.f32 %v211, 1.442695
    %v218 = vpow.pop %v217
    %v219 = vmul.f32 %v212, 1.442695
    %v220 = vpow.pop %v219
    %v221 = vadd.f32 %v214, 1.0
    %v222 = vadd.f32 %v216, 1.0
    %v223 = vadd.f32 %v218, 1.0
    %v224 = vadd.f32 %v220, 1.0
    %v225 = vrcp.pop %v221
    %v226 = vmul.f32 %v221, %v225
    %v227 = vsub.f32 1.0, %v226
    %v228 = vmul.f32 %v225, %v227
    %v229 = vadd.f32 %v225, %v228
    %vm230 = vweird.f32 %v221
    %vm231 = vweird.f32 %v225
    %vm232 = vmor %vm230, %vm231
    %v233 = vsel %vm232, %v225, %v229
    %v234 = vand.u32 2147483647, %v221
    %vm235 = vcmp.eq.f32.partialorder %v234, 8.507059e+37
    %v236 = vand.u32 %v221, 2147483648
    %v237 = vor.u32 1.1754944e-38, %v236
    %v238 = vsel %vm235, %v237, %v233
    %v239 = vmul.f32 1.0, %v238
    %v240 = vrcp.pop %v222
    %v241 = vmul.f32 %v222, %v240
    %v242 = vsub.f32 1.0, %v241
    %v243 = vmul.f32 %v240, %v242
    %v244 = vadd.f32 %v240, %v243
    %vm245 = vweird.f32 %v222
    %vm246 = vweird.f32 %v240
    %vm247 = vmor %vm245, %vm246
    %v248 = vsel %vm247, %v240, %v244
    %v249 = vand.u32 2147483647, %v222
    %vm250 = vcmp.eq.f32.partialorder %v249, 8.507059e+37
    %v251 = vand.u32 %v222, 2147483648
    %v252 = vor.u32 1.1754944e-38, %v251
    %v253 = vsel %vm250, %v252, %v248
    %v254 = vmul.f32 1.0, %v253
    %v255 = vrcp.pop %v223
    %v256 = vmul.f32 %v223, %v255
    %v257 = vsub.f32 1.0, %v256
    %v258 = vmul.f32 %v255, %v257
    %v259 = vadd.f32 %v255, %v258
    %vm260 = vweird.f32 %v223
    %vm261 = vweird.f32 %v255
    %vm262 = vmor %vm260, %vm261
    %v263 = vsel %vm262, %v255, %v259
    %v264 = vand.u32 2147483647, %v223
    %vm265 = vcmp.eq.f32.partialorder %v264, 8.507059e+37
    %v266 = vand.u32 %v223, 2147483648
    %v267 = vor.u32 1.1754944e-38, %v266
    %v268 = vsel %vm265, %v267, %v263
    %v269 = vmul.f32 1.0, %v268
    %v270 = vrcp.pop %v224
    %v271 = vmul.f32 %v224, %v270
    %v272 = vsub.f32 1.0, %v271
    %v273 = vmul.f32 %v270, %v272
    %v274 = vadd.f32 %v270, %v273
    %vm275 = vweird.f32 %v224
    %vm276 = vweird.f32 %v270
    %vm277 = vmor %vm275, %vm276
    %v278 = vsel %vm277, %v270, %v274
    %v279 = vand.u32 2147483647, %v224
    %vm280 = vcmp.eq.f32.partialorder %v279, 8.507059e+37
    %v281 = vand.u32 %v224, 2147483648
    %v282 = vor.u32 1.1754944e-38, %v281
    %v283 = vsel %vm280, %v282, %v278
    %v284 = vmul.f32 1.0, %v283
    %v285 = vtanh.pop %v198
    %v286 = vtanh.pop %v201
    %v287 = vtanh.pop %v204
    %v288 = vtanh.pop %v207
    %v289 = vsub.f32 1.0, %v239
    %v290 = vsub.f32 1.0, %v254
    %v291 = vsub.f32 1.0, %v269
    %v292 = vsub.f32 1.0, %v284
    %297 = vrot.lane.b32.xlu0 %v285, 96
    %v298 = vpop.permute.xlu0 %297
    %299 = vrot.lane.b32.xlu0 %v286, 96
    %v300 = vpop.permute.xlu0 %299
    %301 = vrot.lane.b32.xlu0 %v287, 96
    %v302 = vpop.permute.xlu0 %301
    %303 = vrot.lane.b32.xlu0 %v288, 96
    %v304 = vpop.permute.xlu0 %303
    %v309 = vmul.f32 %v289, %v298
    %v310 = vmul.f32 %v290, %v300
    %v311 = vmul.f32 %v291, %v302
    %v312 = vmul.f32 %v292, %v304
    %v313 = vmax.f32 %v309, 0.0
    %v314 = vmax.f32 %v310, 0.0
    %v315 = vmax.f32 %v311, 0.0
    %v316 = vmax.f32 %v312, 0.0
    %v317 = vld [vmem:[%s6] sm:$0xff]
    %v318 = vld [vmem:[%s6 + $0x8] sm:$0xff]
    %v319 = vld [vmem:[%s6 + $0x10] sm:$0xff]
    %v320 = vld [vmem:[%s6 + $0x18] sm:$0xff]
    %v321 = vld [vmem:[#allocation2] sm:$0x1]
    %v323 = vperm.slane %v321, 0
    %v326 = vsel %vm78, %v313, 0
    %v329 = vsel %vm78, %v314, 0
    %v332 = vsel %vm78, %v315, 0
    %v335 = vsel %vm78, %v316, 0
    %337 = vmatpush.msra.mxu0 0.0
    %338 = vmatpush.msra.mxu0 0.0
    %339 = vmatpush.msra.mxu0 0.0
    %340 = vmatpush.msra.mxu0 0.0
    %341 = vmatpush.msra.mxu0 0.0
    %342 = vmatpush.msra.mxu0 0.0
    %343 = vmatpush.msra.mxu0 0.0
    %344 = vmatpush.msra.mxu0 0.0
    %345 = vmatpush.msra.mxu0 0.0
    %346 = vmatpush.msra.mxu0 0.0
    %347 = vmatpush.msra.mxu0 0.0
    %348 = vmatpush.msra.mxu0 0.0
    %349 = vmatpush.msra.mxu0 %v320
    %350 = vmatpush.msra.mxu0 %v319
    %351 = vmatpush.msra.mxu0 %v318
    %352 = vmatpush.msra.mxu0 %v317
    %353 = vmatmul.f32.gmra.mxu0 %v326
    %v354 = vpop.f32.mrf.mxu0
    %v355 = vadd.f32 %v323, %v354
    %356 = vmatmul.f32.gmra.mxu0 %v329
    %v357 = vpop.f32.mrf.mxu0
    %v358 = vadd.f32 %v323, %v357
    %359 = vmatmul.f32.gmra.mxu0 %v332
    %v360 = vpop.f32.mrf.mxu0
    %v361 = vadd.f32 %v323, %v360
    %362 = vmatmul.f32.gmra.mxu0 %v335
    %v363 = vpop.f32.mrf.mxu0
    %v364 = vadd.f32 %v323, %v363
    %365 = vdwg.mxu0
    %vm366 = vcmask 7168
    %367 = vst.msk [vmem:[%s8] sm:$0xff] %vm366, %v355
    %368 = vst.msk [vmem:[%s8 + $0x8] sm:$0xff] %vm366, %v358
    %369 = vst.msk [vmem:[%s8 + $0x10] sm:$0xff] %vm366, %v361
    %370 = vst.msk [vmem:[%s8 + $0x18] sm:$0xff] %vm366, %v364
    // Predicated region
    $region38: #{tpu_custom_call.1} parent=1 // pred_check
      _
    $region39: #{tpu_custom_call.1} parent=1 // pred_check_branch
      %372 = sbr.rel (0) target = $region41
    $region40: #{tpu_custom_call.1} parent=1 // pred_region
      _
    $region41: #{tpu_custom_call.1} parent=1 // pred_fallthru
      _
    // Predicated region
    $region42: #{tpu_custom_call.1} parent=1 // pred_check
      _
    $region43: #{tpu_custom_call.1} parent=1 // pred_check_branch
      %374 = sbr.rel (0) target = $region45
    $region44: #{tpu_custom_call.1} parent=1 // pred_region
      _
    $region45: #{tpu_custom_call.1} parent=1 // pred_fallthru
      _
    %375 = vsyncpa [#allocation4], 1

</llo_original>
